<compile_context>
chip_gen: v6e
topology: v6e:2x2x1
jax: 0.10.0
libtpu: 0.0.40
codegen_flags: <defaults>
</compile_context>

<pallas_src>
import functools

import jax
import jax.numpy as jnp
from jax.experimental import pallas as pl
from jax.experimental.pallas import tpu as pltpu

LANE = 128     # lane width: feature dims padded to a multiple of this
SUBLANE = 8    # sublane width: batch tile padded to a multiple of this


def _round_up(x: int, m: int) -> int:
    return ((x + m - 1) // m) * m


# ---------------------------------------------------------------------------
# Kernel body
# ---------------------------------------------------------------------------
def _mlp_fused_kernel(*refs, num_layers: int, non_linearity_last: bool,
                      compute_dtype):
    """refs = (x_ref, w0_ref, b0_ref, ..., w{L-1}_ref, b{L-1}_ref, o_ref).

    All layers run back-to-back on one batch tile; hidden activations never
    leave on-chip memory.  Matmuls accumulate in f32 on the MXU; bias-add and
    ReLU stay in f32 on the VPU; the carried activation is re-cast to
    compute_dtype once per layer.
    """
    x_ref = refs[0]
    o_ref = refs[-1]
    wb_refs = refs[1:-1]

    is_f32 = jnp.dtype(compute_dtype) == jnp.dtype(jnp.float32)
    precision = jax.lax.Precision.HIGHEST if is_f32 else None

    h = x_ref[...]                                   # (TILE_B, D0), compute dtype
    for l in range(num_layers):
        w_ref = wb_refs[2 * l]                       # (D_l, D_{l+1}), compute dtype
        b_ref = wb_refs[2 * l + 1]                   # (1,   D_{l+1}), f32
        y = jnp.dot(h, w_ref[...],
                    preferred_element_type=jnp.float32,
                    precision=precision)
        y = y + b_ref[...]                           # broadcast over batch (f32)
        if (l + 1 < num_layers) or non_linearity_last:
            y = jnp.maximum(y, 0.0)
        if l + 1 < num_layers:
            h = y.astype(compute_dtype)              # carry narrow activation
        else:
            h = y
    o_ref[...] = h.astype(o_ref.dtype)


# ---------------------------------------------------------------------------
# One-time parameter preparation (padding + cast hoisted out of the forward)
# ---------------------------------------------------------------------------
def pad_mlp_params(params, compute_dtype=jnp.bfloat16):
    """Pad feature dims to multiples of 128 and cast weights once.

    params: list of (w_t [d_in, d_out], b [1, d_out]) float32
    Returns (padded_params, dims, dims_p) where padded_params is a list of
    (w_p [D_l, D_{l+1}] compute_dtype, b_p [1, D_{l+1}] float32).
    """
    dims = [params[0][0].shape[0]] + [w_t.shape[1] for (w_t, _) in params]
    dims_p = [_round_up(d, LANE) for d in dims]
    padded = []
    for l, (w_t, b) in enumerate(params):
        din, dout = w_t.shape
        wp = jnp.zeros((dims_p[l], dims_p[l + 1]), compute_dtype)
        wp = wp.at[:din, :dout].set(w_t.astype(compute_dtype))
        bp = jnp.zeros((1, dims_p[l + 1]), jnp.float32)
        bp = bp.at[:, :dout].set(b.astype(jnp.float32))
        padded.append((wp, bp))
    return padded, dims, dims_p


# ---------------------------------------------------------------------------
# Forward
# ---------------------------------------------------------------------------
def mlp_forward_fused(x, padded_params, dims, dims_p, *,
                      non_linearity_last: bool = False,
                      compute_dtype=jnp.bfloat16, tile_b: int = 256):
    """Run the whole MLP in one Pallas kernel.

    x:             [B, d0] float32
    padded_params: output of pad_mlp_params (same compute_dtype!)
    Returns [B, d_last] float32 (matches the PyTorch module's forward).
    """
    B, d0 = x.shape
    assert d0 == dims[0]
    num_layers = len(padded_params)
    cbytes = jnp.dtype(compute_dtype).itemsize

    # ---- batch tiling: balanced tiles; >= 2 tiles when batch allows so the
    # "parallel" grid axis can shard across both TensorCores on v7x ----------
    B_p8 = _round_up(B, SUBLANE)
    n_tiles = max(pl.cdiv(B_p8, tile_b), 2 if B >= 2 * SUBLANE else 1)
    TILE_B = _round_up(pl.cdiv(B_p8, n_tiles), SUBLANE)
    n_tiles = pl.cdiv(B_p8, TILE_B)
    B_p = n_tiles * TILE_B

    x_p = jnp.zeros((B_p, dims_p[0]), compute_dtype)
    x_p = x_p.at[:B, :d0].set(x.astype(compute_dtype))

    # ---- block specs: tile the batch axis; weights/bias whole, resident and
    # SINGLE-buffered (their block index never changes across the grid) ------
    grid = (n_tiles,)
    single = pl.Buffered(1)
    in_specs = [pl.BlockSpec((TILE_B, dims_p[0]), lambda i: (i, 0))]
    for l in range(num_layers):
        in_specs.append(pl.BlockSpec((dims_p[l], dims_p[l + 1]),
                                     lambda i: (0, 0), pipeline_mode=single))
        in_specs.append(pl.BlockSpec((1, dims_p[l + 1]),
                                     lambda i: (0, 0), pipeline_mode=single))
    out_specs = pl.BlockSpec((TILE_B, dims_p[-1]), lambda i: (i, 0))

    # ---- VMEM budget: generation-aware cap (~75% of physical VMEM) ---------
    io_bytes = 2 * TILE_B * (dims_p[0] + dims_p[-1]) * cbytes      # double-buffered x/out tiles
    weight_bytes = sum(dims_p[l] * dims_p[l + 1] * cbytes + dims_p[l + 1] * 4
                       for l in range(num_layers))                 # single-buffered
    act_bytes = TILE_B * max(dims_p) * (4 + cbytes)                # f32 y + carried h
    vmem_need = io_bytes + weight_bytes + act_bytes
    try:
        vmem_cap = int(pltpu.get_tpu_info().vmem_capacity_bytes)
    except Exception:
        vmem_cap = 64 * 2**20                                      # conservative (v7x per-TC)
    vmem_budget = (vmem_cap * 3) // 4
    if weight_bytes > vmem_budget:
        # TODO(synk): add a K/N-tiled streamed-weight fallback (f32 accumulator
        # with pl.when init/finalize) for layers whose weights exceed VMEM.
        raise NotImplementedError(
            f"resident weights need {weight_bytes} B > VMEM budget {vmem_budget} B")
    vmem_limit = int(min(max(vmem_need * 5 // 4, 32 * 2**20), vmem_budget))

    # ---- cost estimate (scheduling hint for XLA around the custom call) ----
    flops = sum(2 * B_p * dims_p[l] * dims_p[l + 1] for l in range(num_layers))
    bytes_accessed = (x_p.size * cbytes
                      + sum(w.size * cbytes + b.size * 4 for (w, b) in padded_params)
                      + B_p * dims_p[-1] * cbytes)
    cost = pl.CostEstimate(flops=flops, transcendentals=0,
                           bytes_accessed=bytes_accessed)

    kernel = functools.partial(_mlp_fused_kernel,
                               num_layers=num_layers,
                               non_linearity_last=non_linearity_last,
                               compute_dtype=compute_dtype)

    flat_wb = [a for pair in padded_params for a in pair]
    out_p = pl.pallas_call(
        kernel,
        out_shape=jax.ShapeDtypeStruct((B_p, dims_p[-1]), compute_dtype),
        grid_spec=pltpu.PrefetchScalarGridSpec(
            num_scalar_prefetch=0,
            grid=grid,
            in_specs=in_specs,
            out_specs=out_specs),
        compiler_params=pltpu.CompilerParams(
            dimension_semantics=("parallel",),       # batch tiles -> both TCs on v7x
            vmem_limit_bytes=vmem_limit),
        cost_estimate=cost,
    )(x_p, *flat_wb)

    return out_p[:B, :dims[-1]].astype(jnp.float32)


# ---------------------------------------------------------------------------
# Parameter construction mirroring the PyTorch module
# ---------------------------------------------------------------------------
def orthogonal_init(key, rows, cols, dtype=jnp.float32):
    """Deterministic orthogonal init (mimics nn.init.orthogonal_) for [rows, cols]."""
    transpose = rows < cols
    n, m = (cols, rows) if transpose else (rows, cols)
    a = jax.random.normal(key, (n, m), dtype=jnp.float32)
    q, r = jnp.linalg.qr(a)
    d = jnp.sign(jnp.diagonal(r))
    q = q * d[None, :]
    w = q.T if transpose else q
    return w.astype(dtype)                           # shape [rows, cols]


def make_mlp_params(key, fc_feat_dim_list):
    """Returns list of (w_t [in,out], b [1,out]), orthogonal weights, zero bias."""
    params = []
    for i in range(len(fc_feat_dim_list) - 1):
        key, sub = jax.random.split(key)
        in_f, out_f = fc_feat_dim_list[i], fc_feat_dim_list[i + 1]
        w = orthogonal_init(sub, out_f, in_f)        # PyTorch layout [out, in]
        w_t = jnp.transpose(w)                        # stored as [in, out]
        b = jnp.zeros((1, out_f), dtype=jnp.float32)
        params.append((w_t, b))
    return params


if __name__ == "__main__":
    key = jax.random.PRNGKey(0)
    k_params, k_x = jax.random.split(key)

    # Small MLP: dims [32 -> 64 -> 32], batch = 8 (padded to 128 lanes inside).
    fc_feat_dim_list = [32, 64, 32]
    batch = 8

    params = make_mlp_params(k_params, fc_feat_dim_list)
    x = jax.random.normal(k_x, (batch, fc_feat_dim_list[0]), dtype=jnp.float32)

    # Plain-JAX reference (Linear -> ReLU -> Linear, non_linearity_last=False).
    ref = x
    for i, (w_t, b) in enumerate(params):
        ref = ref @ w_t + b
        if i + 1 < len(params):
            ref = jnp.maximum(ref, 0.0)

    # f32 compute path: strict numerical check (precision=HIGHEST inside).
    pp_f32, dims, dims_p = pad_mlp_params(params, compute_dtype=jnp.float32)
    out_f32 = jax.block_until_ready(
        mlp_forward_fused(x, pp_f32, dims, dims_p,
                          non_linearity_last=False,
                          compute_dtype=jnp.float32))
    assert out_f32.shape == (batch, fc_feat_dim_list[-1])
    assert jnp.allclose(out_f32, ref, atol=1e-4, rtol=1e-4)

    # bf16 compute path (performance default on v6e/v7x): loose check.
    pp_bf16, dims, dims_p = pad_mlp_params(params, compute_dtype=jnp.bfloat16)
    out_bf16 = jax.block_until_ready(
        mlp_forward_fused(x, pp_bf16, dims, dims_p,
                          non_linearity_last=False,
                          compute_dtype=jnp.bfloat16))
    assert out_bf16.shape == (batch, fc_feat_dim_list[-1])
    assert jnp.allclose(out_bf16, ref, atol=1e-1, rtol=1e-1)

    print("KERNEL_OK")
</pallas_src>

<mosaic_0001>
module attributes {stable_mosaic.version = 11 : i64} {
  func.func @_mlp_fused_kernel(%arg0: i32, %arg1: memref<8x128xf32, #tpu.memory_space<vmem>>, %arg2: memref<128x128xf32, #tpu.memory_space<vmem>>, %arg3: memref<1x128xf32, #tpu.memory_space<vmem>>, %arg4: memref<128x128xf32, #tpu.memory_space<vmem>>, %arg5: memref<1x128xf32, #tpu.memory_space<vmem>>, %arg6: memref<8x128xf32, #tpu.memory_space<vmem>>) attributes {dimension_semantics = [#tpu.dimension_semantics<parallel>], iteration_bounds = array<i64: 1>, scalar_prefetch = 0 : i64, scratch_operands = 0 : i64, tpu.core_type = #tpu.core_type<tc>, window_params = [{transform_indices = @transform_0, window_bounds = array<i64: 8, 128>}, {pipeline_mode = #tpu.pipeline_mode<synchronous>, transform_indices = @transform_1, window_bounds = array<i64: 128, 128>}, {pipeline_mode = #tpu.pipeline_mode<synchronous>, transform_indices = @transform_2, window_bounds = array<i64: 1, 128>}, {pipeline_mode = #tpu.pipeline_mode<synchronous>, transform_indices = @transform_3, window_bounds = array<i64: 128, 128>}, {pipeline_mode = #tpu.pipeline_mode<synchronous>, transform_indices = @transform_4, window_bounds = array<i64: 1, 128>}, {transform_indices = @transform_5, window_bounds = array<i64: 8, 128>}]} {
    %c0 = arith.constant 0 : index
    %c0_0 = arith.constant 0 : index
    %0 = vector.load %arg1[%c0, %c0_0] : memref<8x128xf32, #tpu.memory_space<vmem>>, vector<8x128xf32>
    %c0_1 = arith.constant 0 : index
    %c0_2 = arith.constant 0 : index
    %1 = vector.load %arg2[%c0_1, %c0_2] : memref<128x128xf32, #tpu.memory_space<vmem>>, vector<128x128xf32>
    %cst = arith.constant dense<0.000000e+00> : vector<8x128xf32>
    %2 = tpu.matmul %0, %1, %cst {dimension_numbers = #tpu.dot_dimension_numbers<[1], [0], [0], [1], [0, 0, 1, 1], [], []>, precision = #tpu.contract_precision<fp32>} : vector<8x128xf32>, vector<128x128xf32>, vector<8x128xf32> -> vector<8x128xf32>
    %c0_3 = arith.constant 0 : index
    %c0_4 = arith.constant 0 : index
    %3 = vector.load %arg3[%c0_3, %c0_4] : memref<1x128xf32, #tpu.memory_space<vmem>>, vector<1x128xf32>
    %4 = vector.broadcast %3 : vector<1x128xf32> to vector<8x128xf32>
    %5 = arith.addf %2, %4 : vector<8x128xf32>
    %cst_5 = arith.constant 0.000000e+00 : f32
    %6 = vector.broadcast %cst_5 : f32 to vector<8x128xf32>
    %7 = arith.maximumf %5, %6 : vector<8x128xf32>
    %c0_6 = arith.constant 0 : index
    %c0_7 = arith.constant 0 : index
    %8 = vector.load %arg4[%c0_6, %c0_7] : memref<128x128xf32, #tpu.memory_space<vmem>>, vector<128x128xf32>
    %cst_8 = arith.constant dense<0.000000e+00> : vector<8x128xf32>
    %9 = tpu.matmul %7, %8, %cst_8 {dimension_numbers = #tpu.dot_dimension_numbers<[1], [0], [0], [1], [0, 0, 1, 1], [], []>, precision = #tpu.contract_precision<fp32>} : vector<8x128xf32>, vector<128x128xf32>, vector<8x128xf32> -> vector<8x128xf32>
    %c0_9 = arith.constant 0 : index
    %c0_10 = arith.constant 0 : index
    %10 = vector.load %arg5[%c0_9, %c0_10] : memref<1x128xf32, #tpu.memory_space<vmem>>, vector<1x128xf32>
    %11 = vector.broadcast %10 : vector<1x128xf32> to vector<8x128xf32>
    %12 = arith.addf %9, %11 : vector<8x128xf32>
    %c0_11 = arith.constant 0 : index
    %c0_12 = arith.constant 0 : index
    %13 = vector.load %arg6[%c0_11, %c0_12] : memref<8x128xf32, #tpu.memory_space<vmem>>, vector<8x128xf32>
    tpu.vector_store %arg6[%c0_11, %c0_12], %12 {strides = array<i32>} : memref<8x128xf32, #tpu.memory_space<vmem>>, vector<8x128xf32>,
    return
  }
  func.func @transform_0(%arg0: i32) -> (i32, i32) {
    %c0_i32 = arith.constant 0 : i32
    %c0_i32_0 = arith.constant 0 : i32
    return %arg0, %c0_i32 : i32, i32
  }
  func.func @transform_1(%arg0: i32) -> (i32, i32) {
    %c0_i32 = arith.constant 0 : i32
    %c0_i32_0 = arith.constant 0 : i32
    %c0_i32_1 = arith.constant 0 : i32
    return %c0_i32, %c0_i32_0 : i32, i32
  }
  func.func @transform_2(%arg0: i32) -> (i32, i32) {
    %c0_i32 = arith.constant 0 : i32
    %c0_i32_0 = arith.constant 0 : i32
    %c0_i32_1 = arith.constant 0 : i32
    return %c0_i32, %c0_i32_0 : i32, i32
  }
  func.func @transform_3(%arg0: i32) -> (i32, i32) {
    %c0_i32 = arith.constant 0 : i32
    %c0_i32_0 = arith.constant 0 : i32
    %c0_i32_1 = arith.constant 0 : i32
    return %c0_i32, %c0_i32_0 : i32, i32
  }
  func.func @transform_4(%arg0: i32) -> (i32, i32) {
    %c0_i32 = arith.constant 0 : i32
    %c0_i32_0 = arith.constant 0 : i32
    %c0_i32_1 = arith.constant 0 : i32
    return %c0_i32, %c0_i32_0 : i32, i32
  }
  func.func @transform_5(%arg0: i32) -> (i32, i32) {
    %c0_i32 = arith.constant 0 : i32
    %c0_i32_0 = arith.constant 0 : i32
    return %arg0, %c0_i32 : i32, i32
  }
}

</mosaic_0001>

<llo_original>
// kernel: tpu_custom_call.1
$region0: #{tpu_custom_call.1}
  #allocation0 [shape = 'u32[]', space=smem, size = 0x4, offset = 0x4, fixed_abs, tag = 'smem constant byte address 0x4 - core index']
  #allocation1 [shape = 'u32[144,128]{1,0:T(1,128)}', space=vmem, size = 0x12000, scoped, tag = 'internal scratch']
  %s0 = inlined_call_operand.hbm [shape: f32[8,128], index: 0, kind: input, shape index: {}]
  %s1 = inlined_call_operand.hbm [shape: f32[128,128], index: 1, kind: input, shape index: {}]
  %s2 = inlined_call_operand.vmem [shape: f32[1,128], index: 2, kind: input, shape index: {}]
  %s3 = inlined_call_operand.hbm [shape: f32[128,128], index: 3, kind: input, shape index: {}]
  %s4 = inlined_call_operand.vmem [shape: f32[1,128], index: 4, kind: input, shape index: {}]
  %s5 = inlined_call_operand.hbm [shape: f32[8,128], index: 5, kind: output, shape index: {}]
  %s6 = sld [smem:[#allocation0]]
  $region42: #{tpu_custom_call.1} parent=0
    _
  %s8 = ssub.s32 1, %s6
  %s9 = scalar_select 0, %s8, %s6
  $region1: #{tpu_custom_call.1} parent=0
    #allocation2 [shape = 'u8[4096]{0}', space=vmem, size = 0x1000, scoped, tag = 'input window, operand 0, single buffered']
    #allocation3 [shape = 's32[1]{0}', space=sflag, size = 0x4, scoped, tag = 'scoped memory for tpu_custom_call.1']
    #allocation4 [shape = 's32[1]{0}', space=sflag, size = 0x4, scoped, tag = 'scoped memory for tpu_custom_call.1']
    #allocation5 [shape = 'u8[65536]{0}', space=vmem, size = 0x10000, scoped, tag = 'input window, operand 1, single buffered']
    #allocation6 [shape = 's32[1]{0}', space=sflag, size = 0x4, scoped, tag = 'scoped memory for tpu_custom_call.1']
    #allocation7 [shape = 'u8[65536]{0}', space=vmem, size = 0x10000, scoped, tag = 'input window, operand 3, single buffered']
    #allocation8 [shape = 'u8[4096]{0}', space=vmem, size = 0x1000, scoped, tag = 'output window, operand 0, single buffered']
    %10 = vsyncpa [#allocation3], 0
    %11 = vsyncpa [#allocation6], 0
    %12 = vsyncpa [#allocation4], 0
    // Predicated region
    $region2: #{tpu_custom_call.1} parent=1 // pred_check
      _
    $region3: #{tpu_custom_call.1} parent=1 // pred_check_branch
      %14 = sbr.rel (0) target = $region5
    $region4: #{tpu_custom_call.1} parent=1 // pred_region
      %s16 = ssub.s32 128, 128
      %17 = vsyncadd [#allocation3], %s16
      %s19 = sshll.u32 [#allocation2], 4
      %s20 = int_to_ptr.vmem [resolvable:$true] %s19
      %22 = dma.hbm_to_vmem [thread:$0]  %s0, 128, %s20, [#allocation3]
    $region5: #{tpu_custom_call.1} parent=1 // pred_fallthru
      _
    // Predicated region
    $region6: #{tpu_custom_call.1} parent=1 // pred_check
      _
    $region7: #{tpu_custom_call.1} parent=1 // pred_check_branch
      %24 = sbr.rel (0) target = $region9
    $region8: #{tpu_custom_call.1} parent=1 // pred_region
      %s26 = ssub.s32 2048, 2048
      %27 = vsyncadd [#allocation6], %s26
      %s28 = sshll.u32 [#allocation5], 4
      %s29 = int_to_ptr.vmem [resolvable:$true] %s28
      %34 = dma.hbm_to_vmem [thread:$0]  %s1, 2048, %s29, [#allocation6], 128, 128, 8
    $region9: #{tpu_custom_call.1} parent=1 // pred_fallthru
      _
    // Predicated region
    $region10: #{tpu_custom_call.1} parent=1 // pred_check
      _
    $region11: #{tpu_custom_call.1} parent=1 // pred_check_branch
      %36 = sbr.rel (0) target = $region13
    $region12: #{tpu_custom_call.1} parent=1 // pred_region
      _
    $region13: #{tpu_custom_call.1} parent=1 // pred_fallthru
      _
    // Predicated region
    $region14: #{tpu_custom_call.1} parent=1 // pred_check
      _
    $region15: #{tpu_custom_call.1} parent=1 // pred_check_branch
      %38 = sbr.rel (0) target = $region17
    $region16: #{tpu_custom_call.1} parent=1 // pred_region
      %s40 = ssub.s32 2048, 2048
      %41 = vsyncadd [#allocation6], %s40
      %s42 = sshll.u32 [#allocation7], 4
      %s43 = int_to_ptr.vmem [resolvable:$true] %s42
      %48 = dma.hbm_to_vmem [thread:$0]  %s3, 2048, %s43, [#allocation6], 128, 128, 8
    $region17: #{tpu_custom_call.1} parent=1 // pred_fallthru
      _
    // Predicated region
    $region18: #{tpu_custom_call.1} parent=1 // pred_check
      _
    $region19: #{tpu_custom_call.1} parent=1 // pred_check_branch
      %50 = sbr.rel (0) target = $region21
    $region20: #{tpu_custom_call.1} parent=1 // pred_region
      _
    $region21: #{tpu_custom_call.1} parent=1 // pred_fallthru
      _
    // Predicated region
    $region22: #{tpu_custom_call.1} parent=1 // pred_check
      _
    $region23: #{tpu_custom_call.1} parent=1 // pred_check_branch
      %52 = sbr.rel (0) target = $region25
    $region24: #{tpu_custom_call.1} parent=1 // pred_region
      %53 = dma.done [#allocation3], 128
    $region25: #{tpu_custom_call.1} parent=1 // pred_fallthru
      _
    // Predicated region
    $region26: #{tpu_custom_call.1} parent=1 // pred_check
      _
    $region27: #{tpu_custom_call.1} parent=1 // pred_check_branch
      %55 = sbr.rel (0) target = $region29
    $region28: #{tpu_custom_call.1} parent=1 // pred_region
      %56 = dma.done [#allocation6], 2048
    $region29: #{tpu_custom_call.1} parent=1 // pred_fallthru
      _
    // Predicated region
    $region30: #{tpu_custom_call.1} parent=1 // pred_check
      _
    $region31: #{tpu_custom_call.1} parent=1 // pred_check_branch
      %58 = sbr.rel (0) target = $region33
    $region32: #{tpu_custom_call.1} parent=1 // pred_region
      %59 = dma.done [#allocation6], 2048
    $region33: #{tpu_custom_call.1} parent=1 // pred_fallthru
      _
    %v60 = vld [vmem:[#allocation2] sm:$0xff]
    %v61 = vld [vmem:[#allocation5] sm:$0xff]
    %v62 = vld [vmem:[#allocation5 + $0x8] sm:$0xff]
    %v63 = vld [vmem:[#allocation5 + $0x10] sm:$0xff]
    %v64 = vld [vmem:[#allocation5 + $0x18] sm:$0xff]
    %v65 = vld [vmem:[#allocation5 + $0x20] sm:$0xff]
    %v66 = vld [vmem:[#allocation5 + $0x28] sm:$0xff]
    %v67 = vld [vmem:[#allocation5 + $0x30] sm:$0xff]
    %v68 = vld [vmem:[#allocation5 + $0x38] sm:$0xff]
    %v69 = vld [vmem:[#allocation5 + $0x40] sm:$0xff]
    %v70 = vld [vmem:[#allocation5 + $0x48] sm:$0xff]
    %v71 = vld [vmem:[#allocation5 + $0x50] sm:$0xff]
    %v72 = vld [vmem:[#allocation5 + $0x58] sm:$0xff]
    %v73 = vld [vmem:[#allocation5 + $0x60] sm:$0xff]
    %v74 = vld [vmem:[#allocation5 + $0x68] sm:$0xff]
    %v75 = vld [vmem:[#allocation5 + $0x70] sm:$0xff]
    %v76 = vld [vmem:[#allocation5 + $0x78] sm:$0xff]
    %v77 = vld [vmem:[%s2] sm:$0x1]
    %v79 = vlaneseq
    %v80 = vshrl.u32 %v79, 7
    %v81 = vsub.s32 0, %v80
    %v82 = vrot.slane %v77, %v81
    %84 = vmatprep.subr.mxu0 0.0
    %v85 = vand.u32 %v76, 4294901760
    %86 = vmatpush1.msra.mxu0 %v85
    %87 = vmatprep.subr.mxu0 0.0
    %v88 = vand.u32 %v75, 4294901760
    %89 = vmatpush1.msra.mxu0 %v88
    %90 = vmatprep.subr.mxu0 0.0
    %v91 = vand.u32 %v74, 4294901760
    %92 = vmatpush1.msra.mxu0 %v91
    %93 = vmatprep.subr.mxu0 0.0
    %v94 = vand.u32 %v73, 4294901760
    %95 = vmatpush1.msra.mxu0 %v94
    %96 = vmatprep.subr.mxu0 0.0
    %v97 = vand.u32 %v72, 4294901760
    %98 = vmatpush1.msra.mxu0 %v97
    %99 = vmatprep.subr.mxu0 0.0
    %v100 = vand.u32 %v71, 4294901760
    %101 = vmatpush1.msra.mxu0 %v100
    %102 = vmatprep.subr.mxu0 0.0
    %v103 = vand.u32 %v70, 4294901760
    %104 = vmatpush1.msra.mxu0 %v103
    %105 = vmatprep.subr.mxu0 0.0
    %v106 = vand.u32 %v69, 4294901760
    %107 = vmatpush1.msra.mxu0 %v106
    %108 = vmatprep.subr.mxu0 0.0
    %v109 = vand.u32 %v68, 4294901760
    %110 = vmatpush1.msra.mxu0 %v109
    %111 = vmatprep.subr.mxu0 0.0
    %v112 = vand.u32 %v67, 4294901760
    %113 = vmatpush1.msra.mxu0 %v112
    %114 = vmatprep.subr.mxu0 0.0
    %v115 = vand.u32 %v66, 4294901760
    %116 = vmatpush1.msra.mxu0 %v115
    %117 = vmatprep.subr.mxu0 0.0
    %v118 = vand.u32 %v65, 4294901760
    %119 = vmatpush1.msra.mxu0 %v118
    %120 = vmatprep.subr.mxu0 0.0
    %v121 = vand.u32 %v64, 4294901760
    %122 = vmatpush1.msra.mxu0 %v121
    %123 = vmatprep.subr.mxu0 0.0
    %v124 = vand.u32 %v63, 4294901760
    %125 = vmatpush1.msra.mxu0 %v124
    %126 = vmatprep.subr.mxu0 0.0
    %v127 = vand.u32 %v62, 4294901760
    %128 = vmatpush1.msra.mxu0 %v127
    %129 = vmatprep.subr.mxu0 0.0
    %v130 = vand.u32 %v61, 4294901760
    %131 = vmatpush1.msra.mxu0 %v130
    %132 = vmatprep.subr.mxu0 0.0
    %133 = vmatpush2.msra.mxu0 0.0
    %134 = vmatprep.subr.mxu0 0.0
    %135 = vmatpush2.msra.mxu0 0.0
    %136 = vmatprep.subr.mxu0 0.0
    %137 = vmatpush2.msra.mxu0 0.0
    %138 = vmatprep.subr.mxu0 0.0
    %139 = vmatpush2.msra.mxu0 0.0
    %140 = vmatprep.subr.mxu0 0.0
    %141 = vmatpush2.msra.mxu0 0.0
    %142 = vmatprep.subr.mxu0 0.0
    %143 = vmatpush2.msra.mxu0 0.0
    %144 = vmatprep.subr.mxu0 0.0
    %145 = vmatpush2.msra.mxu0 0.0
    %146 = vmatprep.subr.mxu0 0.0
    %147 = vmatpush2.msra.mxu0 0.0
    %148 = vmatprep.subr.mxu0 0.0
    %149 = vmatpush2.msra.mxu0 0.0
    %150 = vmatprep.subr.mxu0 0.0
    %151 = vmatpush2.msra.mxu0 0.0
    %152 = vmatprep.subr.mxu0 0.0
    %153 = vmatpush2.msra.mxu0 0.0
    %154 = vmatprep.subr.mxu0 0.0
    %155 = vmatpush2.msra.mxu0 0.0
    %156 = vmatprep.subr.mxu0 0.0
    %157 = vmatpush2.msra.mxu0 0.0
    %158 = vmatprep.subr.mxu0 0.0
    %159 = vmatpush2.msra.mxu0 0.0
    %160 = vmatprep.subr.mxu0 0.0
    %161 = vmatpush2.msra.mxu0 0.0
    %162 = vmatprep.subr.mxu0 0.0
    %163 = vmatpush2.msra.mxu0 0.0
    %164 = vmatprep.mubr.f32.mxu0 0.0
    %v165 = vand.u32 %v60, 4294901760
    %v166 = vsub.f32 %v60, %v165
    %v167 = vand.u32 %v166, 4294901760
    %v168 = vsub.f32 %v166, %v167
    %v169 = vand.u32 %v168, 4294901760
    %170 = vmatmul.mubr.f32.gmra.mxu0 %v169
    %v171 = vpop.f32.mrf.mxu0
    %v172 = vadd.f32 %v82, %v171
    %v173 = vpop.f32.mrf.mxu0
    %174 = vdwg.mxu0
    %175 = vmatprep.subr.mxu0 0.0
    %v176 = vand.u32 %v76, 4294901760
    %v177 = vsub.f32 %v76, %v176
    %v178 = vand.u32 %v177, 4294901760
    %v179 = vsub.f32 %v177, %v178
    %v180 = vand.u32 %v179, 4294901760
    %181 = vmatpush1.msra.mxu0 %v180
    %182 = vmatprep.subr.mxu0 0.0
    %v183 = vand.u32 %v75, 4294901760
    %v184 = vsub.f32 %v75, %v183
    %v185 = vand.u32 %v184, 4294901760
    %v186 = vsub.f32 %v184, %v185
    %v187 = vand.u32 %v186, 4294901760
    %188 = vmatpush1.msra.mxu0 %v187
    %189 = vmatprep.subr.mxu0 0.0
    %v190 = vand.u32 %v74, 4294901760
    %v191 = vsub.f32 %v74, %v190
    %v192 = vand.u32 %v191, 4294901760
    %v193 = vsub.f32 %v191, %v192
    %v194 = vand.u32 %v193, 4294901760
    %195 = vmatpush1.msra.mxu0 %v194
    %196 = vmatprep.subr.mxu0 0.0
    %v197 = vand.u32 %v73, 4294901760
    %v198 = vsub.f32 %v73, %v197
    %v199 = vand.u32 %v198, 4294901760
    %v200 = vsub.f32 %v198, %v199
    %v201 = vand.u32 %v200, 4294901760
    %202 = vmatpush1.msra.mxu0 %v201
    %203 = vmatprep.subr.mxu0 0.0
    %v204 = vand.u32 %v72, 4294901760
    %v205 = vsub.f32 %v72, %v204
    %v206 = vand.u32 %v205, 4294901760
    %v207 = vsub.f32 %v205, %v206
    %v208 = vand.u32 %v207, 4294901760
    %209 = vmatpush1.msra.mxu0 %v208
    %210 = vmatprep.subr.mxu0 0.0
    %v211 = vand.u32 %v71, 4294901760
    %v212 = vsub.f32 %v71, %v211
    %v213 = vand.u32 %v212, 4294901760
    %v214 = vsub.f32 %v212, %v213
    %v215 = vand.u32 %v214, 4294901760
    %216 = vmatpush1.msra.mxu0 %v215
    %217 = vmatprep.subr.mxu0 0.0
    %v218 = vand.u32 %v70, 4294901760
    %v219 = vsub.f32 %v70, %v218
    %v220 = vand.u32 %v219, 4294901760
    %v221 = vsub.f32 %v219, %v220
    %v222 = vand.u32 %v221, 4294901760
    %223 = vmatpush1.msra.mxu0 %v222
    %224 = vmatprep.subr.mxu0 0.0
    %v225 = vand.u32 %v69, 4294901760
    %v226 = vsub.f32 %v69, %v225
    %v227 = vand.u32 %v226, 4294901760
    %v228 = vsub.f32 %v226, %v227
    %v229 = vand.u32 %v228, 4294901760
    %230 = vmatpush1.msra.mxu0 %v229
    %231 = vmatprep.subr.mxu0 0.0
    %v232 = vand.u32 %v68, 4294901760
    %v233 = vsub.f32 %v68, %v232
    %v234 = vand.u32 %v233, 4294901760
    %v235 = vsub.f32 %v233, %v234
    %v236 = vand.u32 %v235, 4294901760
    %237 = vmatpush1.msra.mxu0 %v236
    %238 = vmatprep.subr.mxu0 0.0
    %v239 = vand.u32 %v67, 4294901760
    %v240 = vsub.f32 %v67, %v239
    %v241 = vand.u32 %v240, 4294901760
    %v242 = vsub.f32 %v240, %v241
    %v243 = vand.u32 %v242, 4294901760
    %244 = vmatpush1.msra.mxu0 %v243
    %245 = vmatprep.subr.mxu0 0.0
    %v246 = vand.u32 %v66, 4294901760
    %v247 = vsub.f32 %v66, %v246
    %v248 = vand.u32 %v247, 4294901760
    %v249 = vsub.f32 %v247, %v248
    %v250 = vand.u32 %v249, 4294901760
    %251 = vmatpush1.msra.mxu0 %v250
    %252 = vmatprep.subr.mxu0 0.0
    %v253 = vand.u32 %v65, 4294901760
    %v254 = vsub.f32 %v65, %v253
    %v255 = vand.u32 %v254, 4294901760
    %v256 = vsub.f32 %v254, %v255
    %v257 = vand.u32 %v256, 4294901760
    %258 = vmatpush1.msra.mxu0 %v257
    %259 = vmatprep.subr.mxu0 0.0
    %v260 = vand.u32 %v64, 4294901760
    %v261 = vsub.f32 %v64, %v260
    %v262 = vand.u32 %v261, 4294901760
    %v263 = vsub.f32 %v261, %v262
    %v264 = vand.u32 %v263, 4294901760
    %265 = vmatpush1.msra.mxu0 %v264
    %266 = vmatprep.subr.mxu0 0.0
    %v267 = vand.u32 %v63, 4294901760
    %v268 = vsub.f32 %v63, %v267
    %v269 = vand.u32 %v268, 4294901760
    %v270 = vsub.f32 %v268, %v269
    %v271 = vand.u32 %v270, 4294901760
    %272 = vmatpush1.msra.mxu0 %v271
    %273 = vmatprep.subr.mxu0 0.0
    %v274 = vand.u32 %v62, 4294901760
    %v275 = vsub.f32 %v62, %v274
    %v276 = vand.u32 %v275, 4294901760
    %v277 = vsub.f32 %v275, %v276
    %v278 = vand.u32 %v277, 4294901760
    %279 = vmatpush1.msra.mxu0 %v278
    %280 = vmatprep.subr.mxu0 0.0
    %v281 = vand.u32 %v61, 4294901760
    %v282 = vsub.f32 %v61, %v281
    %v283 = vand.u32 %v282, 4294901760
    %v284 = vsub.f32 %v282, %v283
    %v285 = vand.u32 %v284, 4294901760
    %286 = vmatpush1.msra.mxu0 %v285
    %287 = vmatprep.subr.mxu0 0.0
    %288 = vmatpush2.msra.mxu0 0.0
    %289 = vmatprep.subr.mxu0 0.0
    %290 = vmatpush2.msra.mxu0 0.0
    %291 = vmatprep.subr.mxu0 0.0
    %292 = vmatpush2.msra.mxu0 0.0
    %293 = vmatprep.subr.mxu0 0.0
    %294 = vmatpush2.msra.mxu0 0.0
    %295 = vmatprep.subr.mxu0 0.0
    %296 = vmatpush2.msra.mxu0 0.0
    %297 = vmatprep.subr.mxu0 0.0
    %298 = vmatpush2.msra.mxu0 0.0
    %299 = vmatprep.subr.mxu0 0.0
    %300 = vmatpush2.msra.mxu0 0.0
    %301 = vmatprep.subr.mxu0 0.0
    %302 = vmatpush2.msra.mxu0 0.0
    %303 = vmatprep.subr.mxu0 0.0
    %304 = vmatpush2.msra.mxu0 0.0
    %305 = vmatprep.subr.mxu0 0.0
    %306 = vmatpush2.msra.mxu0 0.0
    %307 = vmatprep.subr.mxu0 0.0
    %308 = vmatpush2.msra.mxu0 0.0
    %309 = vmatprep.subr.mxu0 0.0
    %310 = vmatpush2.msra.mxu0 0.0
    %311 = vmatprep.subr.mxu0 0.0
    %312 = vmatpush2.msra.mxu0 0.0
    %313 = vmatprep.subr.mxu0 0.0
    %314 = vmatpush2.msra.mxu0 0.0
    %315 = vmatprep.subr.mxu0 0.0
    %316 = vmatpush2.msra.mxu0 0.0
    %317 = vmatprep.subr.mxu0 0.0
    %318 = vmatpush2.msra.mxu0 0.0
    %319 = vmatprep.mubr.f32.mxu0 0.0
    %v320 = vand.u32 %v60, 4294901760
    %321 = vmatmul.mubr.f32.gmra.mxu0 %v320
    %v322 = vpop.f32.mrf.mxu0
    %v323 = vadd.f32 %v172, %v322
    %v324 = vpop.f32.mrf.mxu0
    %325 = vdwg.mxu0
    %326 = vmatprep.subr.mxu0 0.0
    %v327 = vand.u32 %v76, 4294901760
    %v328 = vsub.f32 %v76, %v327
    %329 = vmatpush1.msra.mxu0 %v328
    %330 = vmatprep.subr.mxu0 0.0
    %v331 = vand.u32 %v75, 4294901760
    %v332 = vsub.f32 %v75, %v331
    %333 = vmatpush1.msra.mxu0 %v332
    %334 = vmatprep.subr.mxu0 0.0
    %v335 = vand.u32 %v74, 4294901760
    %v336 = vsub.f32 %v74, %v335
    %337 = vmatpush1.msra.mxu0 %v336
    %338 = vmatprep.subr.mxu0 0.0
    %v339 = vand.u32 %v73, 4294901760
    %v340 = vsub.f32 %v73, %v339
    %341 = vmatpush1.msra.mxu0 %v340
    %342 = vmatprep.subr.mxu0 0.0
    %v343 = vand.u32 %v72, 4294901760
    %v344 = vsub.f32 %v72, %v343
    %345 = vmatpush1.msra.mxu0 %v344
    %346 = vmatprep.subr.mxu0 0.0
    %v347 = vand.u32 %v71, 4294901760
    %v348 = vsub.f32 %v71, %v347
    %349 = vmatpush1.msra.mxu0 %v348
    %350 = vmatprep.subr.mxu0 0.0
    %v351 = vand.u32 %v70, 4294901760
    %v352 = vsub.f32 %v70, %v351
    %353 = vmatpush1.msra.mxu0 %v352
    %354 = vmatprep.subr.mxu0 0.0
    %v355 = vand.u32 %v69, 4294901760
    %v356 = vsub.f32 %v69, %v355
    %357 = vmatpush1.msra.mxu0 %v356
    %358 = vmatprep.subr.mxu0 0.0
    %v359 = vand.u32 %v68, 4294901760
    %v360 = vsub.f32 %v68, %v359
    %361 = vmatpush1.msra.mxu0 %v360
    %362 = vmatprep.subr.mxu0 0.0
    %v363 = vand.u32 %v67, 4294901760
    %v364 = vsub.f32 %v67, %v363
    %365 = vmatpush1.msra.mxu0 %v364
    %366 = vmatprep.subr.mxu0 0.0
    %v367 = vand.u32 %v66, 4294901760
    %v368 = vsub.f32 %v66, %v367
    %369 = vmatpush1.msra.mxu0 %v368
    %370 = vmatprep.subr.mxu0 0.0
    %v371 = vand.u32 %v65, 4294901760
    %v372 = vsub.f32 %v65, %v371
    %373 = vmatpush1.msra.mxu0 %v372
    %374 = vmatprep.subr.mxu0 0.0
    %v375 = vand.u32 %v64, 4294901760
    %v376 = vsub.f32 %v64, %v375
    %377 = vmatpush1.msra.mxu0 %v376
    %378 = vmatprep.subr.mxu0 0.0
    %v379 = vand.u32 %v63, 4294901760
    %v380 = vsub.f32 %v63, %v379
    %381 = vmatpush1.msra.mxu0 %v380
    %382 = vmatprep.subr.mxu0 0.0
    %v383 = vand.u32 %v62, 4294901760
    %v384 = vsub.f32 %v62, %v383
    %385 = vmatpush1.msra.mxu0 %v384
    %386 = vmatprep.subr.mxu0 0.0
    %v387 = vand.u32 %v61, 4294901760
    %v388 = vsub.f32 %v61, %v387
    %389 = vmatpush1.msra.mxu0 %v388
    %390 = vmatprep.subr.mxu0 0.0
    %391 = vmatpush2.msra.mxu0 0.0
    %392 = vmatprep.subr.mxu0 0.0
    %393 = vmatpush2.msra.mxu0 0.0
    %394 = vmatprep.subr.mxu0 0.0
    %395 = vmatpush2.msra.mxu0 0.0
    %396 = vmatprep.subr.mxu0 0.0
    %397 = vmatpush2.msra.mxu0 0.0
    %398 = vmatprep.subr.mxu0 0.0
    %399 = vmatpush2.msra.mxu0 0.0
    %400 = vmatprep.subr.mxu0 0.0
    %401 = vmatpush2.msra.mxu0 0.0
    %402 = vmatprep.subr.mxu0 0.0
    %403 = vmatpush2.msra.mxu0 0.0
    %404 = vmatprep.subr.mxu0 0.0
    %405 = vmatpush2.msra.mxu0 0.0
    %406 = vmatprep.subr.mxu0 0.0
    %407 = vmatpush2.msra.mxu0 0.0
    %408 = vmatprep.subr.mxu0 0.0
    %409 = vmatpush2.msra.mxu0 0.0
    %410 = vmatprep.subr.mxu0 0.0
    %411 = vmatpush2.msra.mxu0 0.0
    %412 = vmatprep.subr.mxu0 0.0
    %413 = vmatpush2.msra.mxu0 0.0
    %414 = vmatprep.subr.mxu0 0.0
    %415 = vmatpush2.msra.mxu0 0.0
    %416 = vmatprep.subr.mxu0 0.0
    %417 = vmatpush2.msra.mxu0 0.0
    %418 = vmatprep.subr.mxu0 0.0
    %419 = vmatpush2.msra.mxu0 0.0
    %420 = vmatprep.subr.mxu0 0.0
    %421 = vmatpush2.msra.mxu0 0.0
    %422 = vmatprep.mubr.f32.mxu0 0.0
    %v423 = vand.u32 %v60, 4294901760
    %v424 = vsub.f32 %v60, %v423
    %425 = vmatmul.mubr.f32.gmra.mxu0 %v424
    %v426 = vpop.f32.mrf.mxu0
    %v427 = vadd.f32 %v323, %v426
    %v428 = vpop.f32.mrf.mxu0
    %429 = vdwg.mxu0
    %430 = vmatprep.subr.mxu0 0.0
    %v431 = vand.u32 %v76, 4294901760
    %432 = vmatpush1.msra.mxu0 %v431
    %433 = vmatprep.subr.mxu0 0.0
    %v434 = vand.u32 %v75, 4294901760
    %435 = vmatpush1.msra.mxu0 %v434
    %436 = vmatprep.subr.mxu0 0.0
    %v437 = vand.u32 %v74, 4294901760
    %438 = vmatpush1.msra.mxu0 %v437
    %439 = vmatprep.subr.mxu0 0.0
    %v440 = vand.u32 %v73, 4294901760
    %441 = vmatpush1.msra.mxu0 %v440
    %442 = vmatprep.subr.mxu0 0.0
    %v443 = vand.u32 %v72, 4294901760
    %444 = vmatpush1.msra.mxu0 %v443
    %445 = vmatprep.subr.mxu0 0.0
    %v446 = vand.u32 %v71, 4294901760
    %447 = vmatpush1.msra.mxu0 %v446
    %448 = vmatprep.subr.mxu0 0.0
    %v449 = vand.u32 %v70, 4294901760
    %450 = vmatpush1.msra.mxu0 %v449
    %451 = vmatprep.subr.mxu0 0.0
    %v452 = vand.u32 %v69, 4294901760
    %453 = vmatpush1.msra.mxu0 %v452
    %454 = vmatprep.subr.mxu0 0.0
    %v455 = vand.u32 %v68, 4294901760
    %456 = vmatpush1.msra.mxu0 %v455
    %457 = vmatprep.subr.mxu0 0.0
    %v458 = vand.u32 %v67, 4294901760
    %459 = vmatpush1.msra.mxu0 %v458
    %460 = vmatprep.subr.mxu0 0.0
    %v461 = vand.u32 %v66, 4294901760
    %462 = vmatpush1.msra.mxu0 %v461
    %463 = vmatprep.subr.mxu0 0.0
    %v464 = vand.u32 %v65, 4294901760
    %465 = vmatpush1.msra.mxu0 %v464
    %466 = vmatprep.subr.mxu0 0.0
    %v467 = vand.u32 %v64, 4294901760
    %468 = vmatpush1.msra.mxu0 %v467
    %469 = vmatprep.subr.mxu0 0.0
    %v470 = vand.u32 %v63, 4294901760
    %471 = vmatpush1.msra.mxu0 %v470
    %472 = vmatprep.subr.mxu0 0.0
    %v473 = vand.u32 %v62, 4294901760
    %474 = vmatpush1.msra.mxu0 %v473
    %475 = vmatprep.subr.mxu0 0.0
    %v476 = vand.u32 %v61, 4294901760
    %477 = vmatpush1.msra.mxu0 %v476
    %478 = vmatprep.subr.mxu0 0.0
    %479 = vmatpush2.msra.mxu0 0.0
    %480 = vmatprep.subr.mxu0 0.0
    %481 = vmatpush2.msra.mxu0 0.0
    %482 = vmatprep.subr.mxu0 0.0
    %483 = vmatpush2.msra.mxu0 0.0
    %484 = vmatprep.subr.mxu0 0.0
    %485 = vmatpush2.msra.mxu0 0.0
    %486 = vmatprep.subr.mxu0 0.0
    %487 = vmatpush2.msra.mxu0 0.0
    %488 = vmatprep.subr.mxu0 0.0
    %489 = vmatpush2.msra.mxu0 0.0
    %490 = vmatprep.subr.mxu0 0.0
    %491 = vmatpush2.msra.mxu0 0.0
    %492 = vmatprep.subr.mxu0 0.0
    %493 = vmatpush2.msra.mxu0 0.0
    %494 = vmatprep.subr.mxu0 0.0
    %495 = vmatpush2.msra.mxu0 0.0
    %496 = vmatprep.subr.mxu0 0.0
    %497 = vmatpush2.msra.mxu0 0.0
    %498 = vmatprep.subr.mxu0 0.0
    %499 = vmatpush2.msra.mxu0 0.0
    %500 = vmatprep.subr.mxu0 0.0
    %501 = vmatpush2.msra.mxu0 0.0
    %502 = vmatprep.subr.mxu0 0.0
    %503 = vmatpush2.msra.mxu0 0.0
    %504 = vmatprep.subr.mxu0 0.0
    %505 = vmatpush2.msra.mxu0 0.0
    %506 = vmatprep.subr.mxu0 0.0
    %507 = vmatpush2.msra.mxu0 0.0
    %508 = vmatprep.subr.mxu0 0.0
    %509 = vmatpush2.msra.mxu0 0.0
    %510 = vmatprep.mubr.f32.mxu0 0.0
    %v511 = vand.u32 %v60, 4294901760
    %v512 = vsub.f32 %v60, %v511
    %v513 = vand.u32 %v512, 4294901760
    %514 = vmatmul.mubr.f32.gmra.mxu0 %v513
    %v515 = vpop.f32.mrf.mxu0
    %v516 = vadd.f32 %v427, %v515
    %v517 = vpop.f32.mrf.mxu0
    %518 = vdwg.mxu0
    %519 = vmatprep.subr.mxu0 0.0
    %v520 = vand.u32 %v76, 4294901760
    %v521 = vsub.f32 %v76, %v520
    %v522 = vand.u32 %v521, 4294901760
    %523 = vmatpush1.msra.mxu0 %v522
    %524 = vmatprep.subr.mxu0 0.0
    %v525 = vand.u32 %v75, 4294901760
    %v526 = vsub.f32 %v75, %v525
    %v527 = vand.u32 %v526, 4294901760
    %528 = vmatpush1.msra.mxu0 %v527
    %529 = vmatprep.subr.mxu0 0.0
    %v530 = vand.u32 %v74, 4294901760
    %v531 = vsub.f32 %v74, %v530
    %v532 = vand.u32 %v531, 4294901760
    %533 = vmatpush1.msra.mxu0 %v532
    %534 = vmatprep.subr.mxu0 0.0
    %v535 = vand.u32 %v73, 4294901760
    %v536 = vsub.f32 %v73, %v535
    %v537 = vand.u32 %v536, 4294901760
    %538 = vmatpush1.msra.mxu0 %v537
    %539 = vmatprep.subr.mxu0 0.0
    %v540 = vand.u32 %v72, 4294901760
    %v541 = vsub.f32 %v72, %v540
    %v542 = vand.u32 %v541, 4294901760
    %543 = vmatpush1.msra.mxu0 %v542
    %544 = vmatprep.subr.mxu0 0.0
    %v545 = vand.u32 %v71, 4294901760
    %v546 = vsub.f32 %v71, %v545
    %v547 = vand.u32 %v546, 4294901760
    %548 = vmatpush1.msra.mxu0 %v547
    %549 = vmatprep.subr.mxu0 0.0
    %v550 = vand.u32 %v70, 4294901760
    %v551 = vsub.f32 %v70, %v550
    %v552 = vand.u32 %v551, 4294901760
    %553 = vmatpush1.msra.mxu0 %v552
    %554 = vmatprep.subr.mxu0 0.0
    %v555 = vand.u32 %v69, 4294901760
    %v556 = vsub.f32 %v69, %v555
    %v557 = vand.u32 %v556, 4294901760
    %558 = vmatpush1.msra.mxu0 %v557
    %559 = vmatprep.subr.mxu0 0.0
    %v560 = vand.u32 %v68, 4294901760
    %v561 = vsub.f32 %v68, %v560
    %v562 = vand.u32 %v561, 4294901760
    %563 = vmatpush1.msra.mxu0 %v562
    %564 = vmatprep.subr.mxu0 0.0
    %v565 = vand.u32 %v67, 4294901760
    %v566 = vsub.f32 %v67, %v565
    %v567 = vand.u32 %v566, 4294901760
    %568 = vmatpush1.msra.mxu0 %v567
    %569 = vmatprep.subr.mxu0 0.0
    %v570 = vand.u32 %v66, 4294901760
    %v571 = vsub.f32 %v66, %v570
    %v572 = vand.u32 %v571, 4294901760
    %573 = vmatpush1.msra.mxu0 %v572
    %574 = vmatprep.subr.mxu0 0.0
    %v575 = vand.u32 %v65, 4294901760
    %v576 = vsub.f32 %v65, %v575
    %v577 = vand.u32 %v576, 4294901760
    %578 = vmatpush1.msra.mxu0 %v577
    %579 = vmatprep.subr.mxu0 0.0
    %v580 = vand.u32 %v64, 4294901760
    %v581 = vsub.f32 %v64, %v580
    %v582 = vand.u32 %v581, 4294901760
    %583 = vmatpush1.msra.mxu0 %v582
    %584 = vmatprep.subr.mxu0 0.0
    %v585 = vand.u32 %v63, 4294901760
    %v586 = vsub.f32 %v63, %v585
    %v587 = vand.u32 %v586, 4294901760
    %588 = vmatpush1.msra.mxu0 %v587
    %589 = vmatprep.subr.mxu0 0.0
    %v590 = vand.u32 %v62, 4294901760
    %v591 = vsub.f32 %v62, %v590
    %v592 = vand.u32 %v591, 4294901760
    %593 = vmatpush1.msra.mxu0 %v592
    %594 = vmatprep.subr.mxu0 0.0
    %v595 = vand.u32 %v61, 4294901760
    %v596 = vsub.f32 %v61, %v595
    %v597 = vand.u32 %v596, 4294901760
    %598 = vmatpush1.msra.mxu0 %v597
    %599 = vmatprep.subr.mxu0 0.0
    %600 = vmatpush2.msra.mxu0 0.0
    %601 = vmatprep.subr.mxu0 0.0
    %602 = vmatpush2.msra.mxu0 0.0
    %603 = vmatprep.subr.mxu0 0.0
    %604 = vmatpush2.msra.mxu0 0.0
    %605 = vmatprep.subr.mxu0 0.0
    %606 = vmatpush2.msra.mxu0 0.0
    %607 = vmatprep.subr.mxu0 0.0
    %608 = vmatpush2.msra.mxu0 0.0
    %609 = vmatprep.subr.mxu0 0.0
    %610 = vmatpush2.msra.mxu0 0.0
    %611 = vmatprep.subr.mxu0 0.0
    %612 = vmatpush2.msra.mxu0 0.0
    %613 = vmatprep.subr.mxu0 0.0
    %614 = vmatpush2.msra.mxu0 0.0
    %615 = vmatprep.subr.mxu0 0.0
    %616 = vmatpush2.msra.mxu0 0.0
    %617 = vmatprep.subr.mxu0 0.0
    %618 = vmatpush2.msra.mxu0 0.0
    %619 = vmatprep.subr.mxu0 0.0
    %620 = vmatpush2.msra.mxu0 0.0
    %621 = vmatprep.subr.mxu0 0.0
    %622 = vmatpush2.msra.mxu0 0.0
    %623 = vmatprep.subr.mxu0 0.0
    %624 = vmatpush2.msra.mxu0 0.0
    %625 = vmatprep.subr.mxu0 0.0
    %626 = vmatpush2.msra.mxu0 0.0
    %627 = vmatprep.subr.mxu0 0.0
    %628 = vmatpush2.msra.mxu0 0.0
    %629 = vmatprep.subr.mxu0 0.0
    %630 = vmatpush2.msra.mxu0 0.0
    %631 = vmatprep.mubr.f32.mxu0 0.0
    %v632 = vand.u32 %v60, 4294901760
    %633 = vmatmul.mubr.f32.gmra.mxu0 %v632
    %v634 = vpop.f32.mrf.mxu0
    %v635 = vadd.f32 %v516, %v634
    %v636 = vpop.f32.mrf.mxu0
    %637 = vdwg.mxu0
    %638 = vmatprep.subr.mxu0 0.0
    %v639 = vand.u32 %v76, 4294901760
    %640 = vmatpush1.msra.mxu0 %v639
    %641 = vmatprep.subr.mxu0 0.0
    %v642 = vand.u32 %v75, 4294901760
    %643 = vmatpush1.msra.mxu0 %v642
    %644 = vmatprep.subr.mxu0 0.0
    %v645 = vand.u32 %v74, 4294901760
    %646 = vmatpush1.msra.mxu0 %v645
    %647 = vmatprep.subr.mxu0 0.0
    %v648 = vand.u32 %v73, 4294901760
    %649 = vmatpush1.msra.mxu0 %v648
    %650 = vmatprep.subr.mxu0 0.0
    %v651 = vand.u32 %v72, 4294901760
    %652 = vmatpush1.msra.mxu0 %v651
    %653 = vmatprep.subr.mxu0 0.0
    %v654 = vand.u32 %v71, 4294901760
    %655 = vmatpush1.msra.mxu0 %v654
    %656 = vmatprep.subr.mxu0 0.0
    %v657 = vand.u32 %v70, 4294901760
    %658 = vmatpush1.msra.mxu0 %v657
    %659 = vmatprep.subr.mxu0 0.0
    %v660 = vand.u32 %v69, 4294901760
    %661 = vmatpush1.msra.mxu0 %v660
    %662 = vmatprep.subr.mxu0 0.0
    %v663 = vand.u32 %v68, 4294901760
    %664 = vmatpush1.msra.mxu0 %v663
    %665 = vmatprep.subr.mxu0 0.0
    %v666 = vand.u32 %v67, 4294901760
    %667 = vmatpush1.msra.mxu0 %v666
    %668 = vmatprep.subr.mxu0 0.0
    %v669 = vand.u32 %v66, 4294901760
    %670 = vmatpush1.msra.mxu0 %v669
    %671 = vmatprep.subr.mxu0 0.0
    %v672 = vand.u32 %v65, 4294901760
    %673 = vmatpush1.msra.mxu0 %v672
    %674 = vmatprep.subr.mxu0 0.0
    %v675 = vand.u32 %v64, 4294901760
    %676 = vmatpush1.msra.mxu0 %v675
    %677 = vmatprep.subr.mxu0 0.0
    %v678 = vand.u32 %v63, 4294901760
    %679 = vmatpush1.msra.mxu0 %v678
    %680 = vmatprep.subr.mxu0 0.0
    %v681 = vand.u32 %v62, 4294901760
    %682 = vmatpush1.msra.mxu0 %v681
    %683 = vmatprep.subr.mxu0 0.0
    %v684 = vand.u32 %v61, 4294901760
    %685 = vmatpush1.msra.mxu0 %v684
    %686 = vmatprep.subr.mxu0 0.0
    %687 = vmatpush2.msra.mxu0 0.0
    %688 = vmatprep.subr.mxu0 0.0
    %689 = vmatpush2.msra.mxu0 0.0
    %690 = vmatprep.subr.mxu0 0.0
    %691 = vmatpush2.msra.mxu0 0.0
    %692 = vmatprep.subr.mxu0 0.0
    %693 = vmatpush2.msra.mxu0 0.0
    %694 = vmatprep.subr.mxu0 0.0
    %695 = vmatpush2.msra.mxu0 0.0
    %696 = vmatprep.subr.mxu0 0.0
    %697 = vmatpush2.msra.mxu0 0.0
    %698 = vmatprep.subr.mxu0 0.0
    %699 = vmatpush2.msra.mxu0 0.0
    %700 = vmatprep.subr.mxu0 0.0
    %701 = vmatpush2.msra.mxu0 0.0
    %702 = vmatprep.subr.mxu0 0.0
    %703 = vmatpush2.msra.mxu0 0.0
    %704 = vmatprep.subr.mxu0 0.0
    %705 = vmatpush2.msra.mxu0 0.0
    %706 = vmatprep.subr.mxu0 0.0
    %707 = vmatpush2.msra.mxu0 0.0
    %708 = vmatprep.subr.mxu0 0.0
    %709 = vmatpush2.msra.mxu0 0.0
    %710 = vmatprep.subr.mxu0 0.0
    %711 = vmatpush2.msra.mxu0 0.0
    %712 = vmatprep.subr.mxu0 0.0
    %713 = vmatpush2.msra.mxu0 0.0
    %714 = vmatprep.subr.mxu0 0.0
    %715 = vmatpush2.msra.mxu0 0.0
    %716 = vmatprep.subr.mxu0 0.0
    %717 = vmatpush2.msra.mxu0 0.0
    %718 = vmatprep.mubr.f32.mxu0 0.0
    %v719 = vand.u32 %v60, 4294901760
    %720 = vmatmul.mubr.f32.gmra.mxu0 %v719
    %v721 = vpop.f32.mrf.mxu0
    %v722 = vadd.f32 %v635, %v721
    %v723 = vpop.f32.mrf.mxu0
    %724 = vdwg.mxu0
    %v725 = vmax.f32 %v722, 0.0
    %v726 = vld [vmem:[#allocation7] sm:$0xff]
    %v727 = vld [vmem:[#allocation7 + $0x8] sm:$0xff]
    %v728 = vld [vmem:[#allocation7 + $0x10] sm:$0xff]
    %v729 = vld [vmem:[#allocation7 + $0x18] sm:$0xff]
    %v730 = vld [vmem:[#allocation7 + $0x20] sm:$0xff]
    %v731 = vld [vmem:[#allocation7 + $0x28] sm:$0xff]
    %v732 = vld [vmem:[#allocation7 + $0x30] sm:$0xff]
    %v733 = vld [vmem:[#allocation7 + $0x38] sm:$0xff]
    %v734 = vld [vmem:[#allocation7 + $0x40] sm:$0xff]
    %v735 = vld [vmem:[#allocation7 + $0x48] sm:$0xff]
    %v736 = vld [vmem:[#allocation7 + $0x50] sm:$0xff]
    %v737 = vld [vmem:[#allocation7 + $0x58] sm:$0xff]
    %v738 = vld [vmem:[#allocation7 + $0x60] sm:$0xff]
    %v739 = vld [vmem:[#allocation7 + $0x68] sm:$0xff]
    %v740 = vld [vmem:[#allocation7 + $0x70] sm:$0xff]
    %v741 = vld [vmem:[#allocation7 + $0x78] sm:$0xff]
    %v742 = vld [vmem:[%s4] sm:$0x1]
    %v744 = vlaneseq
    %v745 = vshrl.u32 %v744, 7
    %v746 = vsub.s32 0, %v745
    %v747 = vrot.slane %v742, %v746
    %749 = vmatprep.subr.mxu0 0.0
    %v750 = vand.u32 %v741, 4294901760
    %751 = vmatpush1.msra.mxu0 %v750
    %752 = vmatprep.subr.mxu0 0.0
    %v753 = vand.u32 %v740, 4294901760
    %754 = vmatpush1.msra.mxu0 %v753
    %755 = vmatprep.subr.mxu0 0.0
    %v756 = vand.u32 %v739, 4294901760
    %757 = vmatpush1.msra.mxu0 %v756
    %758 = vmatprep.subr.mxu0 0.0
    %v759 = vand.u32 %v738, 4294901760
    %760 = vmatpush1.msra.mxu0 %v759
    %761 = vmatprep.subr.mxu0 0.0
    %v762 = vand.u32 %v737, 4294901760
    %763 = vmatpush1.msra.mxu0 %v762
    %764 = vmatprep.subr.mxu0 0.0
    %v765 = vand.u32 %v736, 4294901760
    %766 = vmatpush1.msra.mxu0 %v765
    %767 = vmatprep.subr.mxu0 0.0
    %v768 = vand.u32 %v735, 4294901760
    %769 = vmatpush1.msra.mxu0 %v768
    %770 = vmatprep.subr.mxu0 0.0
    %v771 = vand.u32 %v734, 4294901760
    %772 = vmatpush1.msra.mxu0 %v771
    %773 = vmatprep.subr.mxu0 0.0
    %v774 = vand.u32 %v733, 4294901760
    %775 = vmatpush1.msra.mxu0 %v774
    %776 = vmatprep.subr.mxu0 0.0
    %v777 = vand.u32 %v732, 4294901760
    %778 = vmatpush1.msra.mxu0 %v777
    %779 = vmatprep.subr.mxu0 0.0
    %v780 = vand.u32 %v731, 4294901760
    %781 = vmatpush1.msra.mxu0 %v780
    %782 = vmatprep.subr.mxu0 0.0
    %v783 = vand.u32 %v730, 4294901760
    %784 = vmatpush1.msra.mxu0 %v783
    %785 = vmatprep.subr.mxu0 0.0
    %v786 = vand.u32 %v729, 4294901760
    %787 = vmatpush1.msra.mxu0 %v786
    %788 = vmatprep.subr.mxu0 0.0
    %v789 = vand.u32 %v728, 4294901760
    %790 = vmatpush1.msra.mxu0 %v789
    %791 = vmatprep.subr.mxu0 0.0
    %v792 = vand.u32 %v727, 4294901760
    %793 = vmatpush1.msra.mxu0 %v792
    %794 = vmatprep.subr.mxu0 0.0
    %v795 = vand.u32 %v726, 4294901760
    %796 = vmatpush1.msra.mxu0 %v795
    %797 = vmatprep.subr.mxu0 0.0
    %798 = vmatpush2.msra.mxu0 0.0
    %799 = vmatprep.subr.mxu0 0.0
    %800 = vmatpush2.msra.mxu0 0.0
    %801 = vmatprep.subr.mxu0 0.0
    %802 = vmatpush2.msra.mxu0 0.0
    %803 = vmatprep.subr.mxu0 0.0
    %804 = vmatpush2.msra.mxu0 0.0
    %805 = vmatprep.subr.mxu0 0.0
    %806 = vmatpush2.msra.mxu0 0.0
    %807 = vmatprep.subr.mxu0 0.0
    %808 = vmatpush2.msra.mxu0 0.0
    %809 = vmatprep.subr.mxu0 0.0
    %810 = vmatpush2.msra.mxu0 0.0
    %811 = vmatprep.subr.mxu0 0.0
    %812 = vmatpush2.msra.mxu0 0.0
    %813 = vmatprep.subr.mxu0 0.0
    %814 = vmatpush2.msra.mxu0 0.0
    %815 = vmatprep.subr.mxu0 0.0
    %816 = vmatpush2.msra.mxu0 0.0
    %817 = vmatprep.subr.mxu0 0.0
    %818 = vmatpush2.msra.mxu0 0.0
    %819 = vmatprep.subr.mxu0 0.0
    %820 = vmatpush2.msra.mxu0 0.0
    %821 = vmatprep.subr.mxu0 0.0
    %822 = vmatpush2.msra.mxu0 0.0
    %823 = vmatprep.subr.mxu0 0.0
    %824 = vmatpush2.msra.mxu0 0.0
    %825 = vmatprep.subr.mxu0 0.0
    %826 = vmatpush2.msra.mxu0 0.0
    %827 = vmatprep.subr.mxu0 0.0
    %828 = vmatpush2.msra.mxu0 0.0
    %829 = vmatprep.mubr.f32.mxu0 0.0
    %v830 = vand.u32 %v725, 4294901760
    %v831 = vsub.f32 %v725, %v830
    %v832 = vand.u32 %v831, 4294901760
    %v833 = vsub.f32 %v831, %v832
    %v834 = vand.u32 %v833, 4294901760
    %835 = vmatmul.mubr.f32.gmra.mxu0 %v834
    %v836 = vpop.f32.mrf.mxu0
    %v837 = vadd.f32 %v747, %v836
    %v838 = vpop.f32.mrf.mxu0
    %839 = vdwg.mxu0
    %840 = vmatprep.subr.mxu0 0.0
    %v841 = vand.u32 %v741, 4294901760
    %v842 = vsub.f32 %v741, %v841
    %v843 = vand.u32 %v842, 4294901760
    %v844 = vsub.f32 %v842, %v843
    %v845 = vand.u32 %v844, 4294901760
    %846 = vmatpush1.msra.mxu0 %v845
    %847 = vmatprep.subr.mxu0 0.0
    %v848 = vand.u32 %v740, 4294901760
    %v849 = vsub.f32 %v740, %v848
    %v850 = vand.u32 %v849, 4294901760
    %v851 = vsub.f32 %v849, %v850
    %v852 = vand.u32 %v851, 4294901760
    %853 = vmatpush1.msra.mxu0 %v852
    %854 = vmatprep.subr.mxu0 0.0
    %v855 = vand.u32 %v739, 4294901760
    %v856 = vsub.f32 %v739, %v855
    %v857 = vand.u32 %v856, 4294901760
    %v858 = vsub.f32 %v856, %v857
    %v859 = vand.u32 %v858, 4294901760
    %860 = vmatpush1.msra.mxu0 %v859
    %861 = vmatprep.subr.mxu0 0.0
    %v862 = vand.u32 %v738, 4294901760
    %v863 = vsub.f32 %v738, %v862
    %v864 = vand.u32 %v863, 4294901760
    %v865 = vsub.f32 %v863, %v864
    %v866 = vand.u32 %v865, 4294901760
    %867 = vmatpush1.msra.mxu0 %v866
    %868 = vmatprep.subr.mxu0 0.0
    %v869 = vand.u32 %v737, 4294901760
    %v870 = vsub.f32 %v737, %v869
    %v871 = vand.u32 %v870, 4294901760
    %v872 = vsub.f32 %v870, %v871
    %v873 = vand.u32 %v872, 4294901760
    %874 = vmatpush1.msra.mxu0 %v873
    %875 = vmatprep.subr.mxu0 0.0
    %v876 = vand.u32 %v736, 4294901760
    %v877 = vsub.f32 %v736, %v876
    %v878 = vand.u32 %v877, 4294901760
    %v879 = vsub.f32 %v877, %v878
    %v880 = vand.u32 %v879, 4294901760
    %881 = vmatpush1.msra.mxu0 %v880
    %882 = vmatprep.subr.mxu0 0.0
    %v883 = vand.u32 %v735, 4294901760
    %v884 = vsub.f32 %v735, %v883
    %v885 = vand.u32 %v884, 4294901760
    %v886 = vsub.f32 %v884, %v885
    %v887 = vand.u32 %v886, 4294901760
    %888 = vmatpush1.msra.mxu0 %v887
    %889 = vmatprep.subr.mxu0 0.0
    %v890 = vand.u32 %v734, 4294901760
    %v891 = vsub.f32 %v734, %v890
    %v892 = vand.u32 %v891, 4294901760
    %v893 = vsub.f32 %v891, %v892
    %v894 = vand.u32 %v893, 4294901760
    %895 = vmatpush1.msra.mxu0 %v894
    %896 = vmatprep.subr.mxu0 0.0
    %v897 = vand.u32 %v733, 4294901760
    %v898 = vsub.f32 %v733, %v897
    %v899 = vand.u32 %v898, 4294901760
    %v900 = vsub.f32 %v898, %v899
    %v901 = vand.u32 %v900, 4294901760
    %902 = vmatpush1.msra.mxu0 %v901
    %903 = vmatprep.subr.mxu0 0.0
    %v904 = vand.u32 %v732, 4294901760
    %v905 = vsub.f32 %v732, %v904
    %v906 = vand.u32 %v905, 4294901760
    %v907 = vsub.f32 %v905, %v906
    %v908 = vand.u32 %v907, 4294901760
    %909 = vmatpush1.msra.mxu0 %v908
    %910 = vmatprep.subr.mxu0 0.0
    %v911 = vand.u32 %v731, 4294901760
    %v912 = vsub.f32 %v731, %v911
    %v913 = vand.u32 %v912, 4294901760
    %v914 = vsub.f32 %v912, %v913
    %v915 = vand.u32 %v914, 4294901760
    %916 = vmatpush1.msra.mxu0 %v915
    %917 = vmatprep.subr.mxu0 0.0
    %v918 = vand.u32 %v730, 4294901760
    %v919 = vsub.f32 %v730, %v918
    %v920 = vand.u32 %v919, 4294901760
    %v921 = vsub.f32 %v919, %v920
    %v922 = vand.u32 %v921, 4294901760
    %923 = vmatpush1.msra.mxu0 %v922
    %924 = vmatprep.subr.mxu0 0.0
    %v925 = vand.u32 %v729, 4294901760
    %v926 = vsub.f32 %v729, %v925
    %v927 = vand.u32 %v926, 4294901760
    %v928 = vsub.f32 %v926, %v927
    %v929 = vand.u32 %v928, 4294901760
    %930 = vmatpush1.msra.mxu0 %v929
    %931 = vmatprep.subr.mxu0 0.0
    %v932 = vand.u32 %v728, 4294901760
    %v933 = vsub.f32 %v728, %v932
    %v934 = vand.u32 %v933, 4294901760
    %v935 = vsub.f32 %v933, %v934
    %v936 = vand.u32 %v935, 4294901760
    %937 = vmatpush1.msra.mxu0 %v936
    %938 = vmatprep.subr.mxu0 0.0
    %v939 = vand.u32 %v727, 4294901760
    %v940 = vsub.f32 %v727, %v939
    %v941 = vand.u32 %v940, 4294901760
    %v942 = vsub.f32 %v940, %v941
    %v943 = vand.u32 %v942, 4294901760
    %944 = vmatpush1.msra.mxu0 %v943
    %945 = vmatprep.subr.mxu0 0.0
    %v946 = vand.u32 %v726, 4294901760
    %v947 = vsub.f32 %v726, %v946
    %v948 = vand.u32 %v947, 4294901760
    %v949 = vsub.f32 %v947, %v948
    %v950 = vand.u32 %v949, 4294901760
    %951 = vmatpush1.msra.mxu0 %v950
    %952 = vmatprep.subr.mxu0 0.0
    %953 = vmatpush2.msra.mxu0 0.0
    %954 = vmatprep.subr.mxu0 0.0
    %955 = vmatpush2.msra.mxu0 0.0
    %956 = vmatprep.subr.mxu0 0.0
    %957 = vmatpush2.msra.mxu0 0.0
    %958 = vmatprep.subr.mxu0 0.0
    %959 = vmatpush2.msra.mxu0 0.0
    %960 = vmatprep.subr.mxu0 0.0
    %961 = vmatpush2.msra.mxu0 0.0
    %962 = vmatprep.subr.mxu0 0.0
    %963 = vmatpush2.msra.mxu0 0.0
    %964 = vmatprep.subr.mxu0 0.0
    %965 = vmatpush2.msra.mxu0 0.0
    %966 = vmatprep.subr.mxu0 0.0
    %967 = vmatpush2.msra.mxu0 0.0
    %968 = vmatprep.subr.mxu0 0.0
    %969 = vmatpush2.msra.mxu0 0.0
    %970 = vmatprep.subr.mxu0 0.0
    %971 = vmatpush2.msra.mxu0 0.0
    %972 = vmatprep.subr.mxu0 0.0
    %973 = vmatpush2.msra.mxu0 0.0
    %974 = vmatprep.subr.mxu0 0.0
    %975 = vmatpush2.msra.mxu0 0.0
    %976 = vmatprep.subr.mxu0 0.0
    %977 = vmatpush2.msra.mxu0 0.0
    %978 = vmatprep.subr.mxu0 0.0
    %979 = vmatpush2.msra.mxu0 0.0
    %980 = vmatprep.subr.mxu0 0.0
    %981 = vmatpush2.msra.mxu0 0.0
    %982 = vmatprep.subr.mxu0 0.0
    %983 = vmatpush2.msra.mxu0 0.0
    %984 = vmatprep.mubr.f32.mxu0 0.0
    %v985 = vand.u32 %v725, 4294901760
    %986 = vmatmul.mubr.f32.gmra.mxu0 %v985
    %v987 = vpop.f32.mrf.mxu0
    %v988 = vadd.f32 %v837, %v987
    %v989 = vpop.f32.mrf.mxu0
    %990 = vdwg.mxu0
    %991 = vmatprep.subr.mxu0 0.0
    %v992 = vand.u32 %v741, 4294901760
    %v993 = vsub.f32 %v741, %v992
    %994 = vmatpush1.msra.mxu0 %v993
    %995 = vmatprep.subr.mxu0 0.0
    %v996 = vand.u32 %v740, 4294901760
    %v997 = vsub.f32 %v740, %v996
    %998 = vmatpush1.msra.mxu0 %v997
    %999 = vmatprep.subr.mxu0 0.0
    %v1000 = vand.u32 %v739, 4294901760
    %v1001 = vsub.f32 %v739, %v1000
    %1002 = vmatpush1.msra.mxu0 %v1001
    %1003 = vmatprep.subr.mxu0 0.0
    %v1004 = vand.u32 %v738, 4294901760
    %v1005 = vsub.f32 %v738, %v1004
    %1006 = vmatpush1.msra.mxu0 %v1005
    %1007 = vmatprep.subr.mxu0 0.0
    %v1008 = vand.u32 %v737, 4294901760
    %v1009 = vsub.f32 %v737, %v1008
    %1010 = vmatpush1.msra.mxu0 %v1009
    %1011 = vmatprep.subr.mxu0 0.0
    %v1012 = vand.u32 %v736, 4294901760
    %v1013 = vsub.f32 %v736, %v1012
    %1014 = vmatpush1.msra.mxu0 %v1013
    %1015 = vmatprep.subr.mxu0 0.0
    %v1016 = vand.u32 %v735, 4294901760
    %v1017 = vsub.f32 %v735, %v1016
    %1018 = vmatpush1.msra.mxu0 %v1017
    %1019 = vmatprep.subr.mxu0 0.0
    %v1020 = vand.u32 %v734, 4294901760
    %v1021 = vsub.f32 %v734, %v1020
    %1022 = vmatpush1.msra.mxu0 %v1021
    %1023 = vmatprep.subr.mxu0 0.0
    %v1024 = vand.u32 %v733, 4294901760
    %v1025 = vsub.f32 %v733, %v1024
    %1026 = vmatpush1.msra.mxu0 %v1025
    %1027 = vmatprep.subr.mxu0 0.0
    %v1028 = vand.u32 %v732, 4294901760
    %v1029 = vsub.f32 %v732, %v1028
    %1030 = vmatpush1.msra.mxu0 %v1029
    %1031 = vmatprep.subr.mxu0 0.0
    %v1032 = vand.u32 %v731, 4294901760
    %v1033 = vsub.f32 %v731, %v1032
    %1034 = vmatpush1.msra.mxu0 %v1033
    %1035 = vmatprep.subr.mxu0 0.0
    %v1036 = vand.u32 %v730, 4294901760
    %v1037 = vsub.f32 %v730, %v1036
    %1038 = vmatpush1.msra.mxu0 %v1037
    %1039 = vmatprep.subr.mxu0 0.0
    %v1040 = vand.u32 %v729, 4294901760
    %v1041 = vsub.f32 %v729, %v1040
    %1042 = vmatpush1.msra.mxu0 %v1041
    %1043 = vmatprep.subr.mxu0 0.0
    %v1044 = vand.u32 %v728, 4294901760
    %v1045 = vsub.f32 %v728, %v1044
    %1046 = vmatpush1.msra.mxu0 %v1045
    %1047 = vmatprep.subr.mxu0 0.0
    %v1048 = vand.u32 %v727, 4294901760
    %v1049 = vsub.f32 %v727, %v1048
    %1050 = vmatpush1.msra.mxu0 %v1049
    %1051 = vmatprep.subr.mxu0 0.0
    %v1052 = vand.u32 %v726, 4294901760
    %v1053 = vsub.f32 %v726, %v1052
    %1054 = vmatpush1.msra.mxu0 %v1053
    %1055 = vmatprep.subr.mxu0 0.0
    %1056 = vmatpush2.msra.mxu0 0.0
    %1057 = vmatprep.subr.mxu0 0.0
    %1058 = vmatpush2.msra.mxu0 0.0
    %1059 = vmatprep.subr.mxu0 0.0
    %1060 = vmatpush2.msra.mxu0 0.0
    %1061 = vmatprep.subr.mxu0 0.0
    %1062 = vmatpush2.msra.mxu0 0.0
    %1063 = vmatprep.subr.mxu0 0.0
    %1064 = vmatpush2.msra.mxu0 0.0
    %1065 = vmatprep.subr.mxu0 0.0
    %1066 = vmatpush2.msra.mxu0 0.0
    %1067 = vmatprep.subr.mxu0 0.0
    %1068 = vmatpush2.msra.mxu0 0.0
    %1069 = vmatprep.subr.mxu0 0.0
    %1070 = vmatpush2.msra.mxu0 0.0
    %1071 = vmatprep.subr.mxu0 0.0
    %1072 = vmatpush2.msra.mxu0 0.0
    %1073 = vmatprep.subr.mxu0 0.0
    %1074 = vmatpush2.msra.mxu0 0.0
    %1075 = vmatprep.subr.mxu0 0.0
    %1076 = vmatpush2.msra.mxu0 0.0
    %1077 = vmatprep.subr.mxu0 0.0
    %1078 = vmatpush2.msra.mxu0 0.0
    %1079 = vmatprep.subr.mxu0 0.0
    %1080 = vmatpush2.msra.mxu0 0.0
    %1081 = vmatprep.subr.mxu0 0.0
    %1082 = vmatpush2.msra.mxu0 0.0
    %1083 = vmatprep.subr.mxu0 0.0
    %1084 = vmatpush2.msra.mxu0 0.0
    %1085 = vmatprep.subr.mxu0 0.0
    %1086 = vmatpush2.msra.mxu0 0.0
    %1087 = vmatprep.mubr.f32.mxu0 0.0
    %v1088 = vand.u32 %v725, 4294901760
    %v1089 = vsub.f32 %v725, %v1088
    %1090 = vmatmul.mubr.f32.gmra.mxu0 %v1089
    %v1091 = vpop.f32.mrf.mxu0
    %v1092 = vadd.f32 %v988, %v1091
    %v1093 = vpop.f32.mrf.mxu0
    %1094 = vdwg.mxu0
    %1095 = vmatprep.subr.mxu0 0.0
    %v1096 = vand.u32 %v741, 4294901760
    %1097 = vmatpush1.msra.mxu0 %v1096
    %1098 = vmatprep.subr.mxu0 0.0
    %v1099 = vand.u32 %v740, 4294901760
    %1100 = vmatpush1.msra.mxu0 %v1099
    %1101 = vmatprep.subr.mxu0 0.0
    %v1102 = vand.u32 %v739, 4294901760
    %1103 = vmatpush1.msra.mxu0 %v1102
    %1104 = vmatprep.subr.mxu0 0.0
    %v1105 = vand.u32 %v738, 4294901760
    %1106 = vmatpush1.msra.mxu0 %v1105
    %1107 = vmatprep.subr.mxu0 0.0
    %v1108 = vand.u32 %v737, 4294901760
    %1109 = vmatpush1.msra.mxu0 %v1108
    %1110 = vmatprep.subr.mxu0 0.0
    %v1111 = vand.u32 %v736, 4294901760
    %1112 = vmatpush1.msra.mxu0 %v1111
    %1113 = vmatprep.subr.mxu0 0.0
    %v1114 = vand.u32 %v735, 4294901760
    %1115 = vmatpush1.msra.mxu0 %v1114
    %1116 = vmatprep.subr.mxu0 0.0
    %v1117 = vand.u32 %v734, 4294901760
    %1118 = vmatpush1.msra.mxu0 %v1117
    %1119 = vmatprep.subr.mxu0 0.0
    %v1120 = vand.u32 %v733, 4294901760
    %1121 = vmatpush1.msra.mxu0 %v1120
    %1122 = vmatprep.subr.mxu0 0.0
    %v1123 = vand.u32 %v732, 4294901760
    %1124 = vmatpush1.msra.mxu0 %v1123
    %1125 = vmatprep.subr.mxu0 0.0
    %v1126 = vand.u32 %v731, 4294901760
    %1127 = vmatpush1.msra.mxu0 %v1126
    %1128 = vmatprep.subr.mxu0 0.0
    %v1129 = vand.u32 %v730, 4294901760
    %1130 = vmatpush1.msra.mxu0 %v1129
    %1131 = vmatprep.subr.mxu0 0.0
    %v1132 = vand.u32 %v729, 4294901760
    %1133 = vmatpush1.msra.mxu0 %v1132
    %1134 = vmatprep.subr.mxu0 0.0
    %v1135 = vand.u32 %v728, 4294901760
    %1136 = vmatpush1.msra.mxu0 %v1135
    %1137 = vmatprep.subr.mxu0 0.0
    %v1138 = vand.u32 %v727, 4294901760
    %1139 = vmatpush1.msra.mxu0 %v1138
    %1140 = vmatprep.subr.mxu0 0.0
    %v1141 = vand.u32 %v726, 4294901760
    %1142 = vmatpush1.msra.mxu0 %v1141
    %1143 = vmatprep.subr.mxu0 0.0
    %1144 = vmatpush2.msra.mxu0 0.0
    %1145 = vmatprep.subr.mxu0 0.0
    %1146 = vmatpush2.msra.mxu0 0.0
    %1147 = vmatprep.subr.mxu0 0.0
    %1148 = vmatpush2.msra.mxu0 0.0
    %1149 = vmatprep.subr.mxu0 0.0
    %1150 = vmatpush2.msra.mxu0 0.0
    %1151 = vmatprep.subr.mxu0 0.0
    %1152 = vmatpush2.msra.mxu0 0.0
    %1153 = vmatprep.subr.mxu0 0.0
    %1154 = vmatpush2.msra.mxu0 0.0
    %1155 = vmatprep.subr.mxu0 0.0
    %1156 = vmatpush2.msra.mxu0 0.0
    %1157 = vmatprep.subr.mxu0 0.0
    %1158 = vmatpush2.msra.mxu0 0.0
    %1159 = vmatprep.subr.mxu0 0.0
    %1160 = vmatpush2.msra.mxu0 0.0
    %1161 = vmatprep.subr.mxu0 0.0
    %1162 = vmatpush2.msra.mxu0 0.0
    %1163 = vmatprep.subr.mxu0 0.0
    %1164 = vmatpush2.msra.mxu0 0.0
    %1165 = vmatprep.subr.mxu0 0.0
    %1166 = vmatpush2.msra.mxu0 0.0
    %1167 = vmatprep.subr.mxu0 0.0
    %1168 = vmatpush2.msra.mxu0 0.0
    %1169 = vmatprep.subr.mxu0 0.0
    %1170 = vmatpush2.msra.mxu0 0.0
    %1171 = vmatprep.subr.mxu0 0.0
    %1172 = vmatpush2.msra.mxu0 0.0
    %1173 = vmatprep.subr.mxu0 0.0
    %1174 = vmatpush2.msra.mxu0 0.0
    %1175 = vmatprep.mubr.f32.mxu0 0.0
    %v1176 = vand.u32 %v725, 4294901760
    %v1177 = vsub.f32 %v725, %v1176
    %v1178 = vand.u32 %v1177, 4294901760
    %1179 = vmatmul.mubr.f32.gmra.mxu0 %v1178
    %v1180 = vpop.f32.mrf.mxu0
    %v1181 = vadd.f32 %v1092, %v1180
    %v1182 = vpop.f32.mrf.mxu0
    %1183 = vdwg.mxu0
    %1184 = vmatprep.subr.mxu0 0.0
    %v1185 = vand.u32 %v741, 4294901760
    %v1186 = vsub.f32 %v741, %v1185
    %v1187 = vand.u32 %v1186, 4294901760
    %1188 = vmatpush1.msra.mxu0 %v1187
    %1189 = vmatprep.subr.mxu0 0.0
    %v1190 = vand.u32 %v740, 4294901760
    %v1191 = vsub.f32 %v740, %v1190
    %v1192 = vand.u32 %v1191, 4294901760
    %1193 = vmatpush1.msra.mxu0 %v1192
    %1194 = vmatprep.subr.mxu0 0.0
    %v1195 = vand.u32 %v739, 4294901760
    %v1196 = vsub.f32 %v739, %v1195
    %v1197 = vand.u32 %v1196, 4294901760
    %1198 = vmatpush1.msra.mxu0 %v1197
    %1199 = vmatprep.subr.mxu0 0.0
    %v1200 = vand.u32 %v738, 4294901760
    %v1201 = vsub.f32 %v738, %v1200
    %v1202 = vand.u32 %v1201, 4294901760
    %1203 = vmatpush1.msra.mxu0 %v1202
    %1204 = vmatprep.subr.mxu0 0.0
    %v1205 = vand.u32 %v737, 4294901760
    %v1206 = vsub.f32 %v737, %v1205
    %v1207 = vand.u32 %v1206, 4294901760
    %1208 = vmatpush1.msra.mxu0 %v1207
    %1209 = vmatprep.subr.mxu0 0.0
    %v1210 = vand.u32 %v736, 4294901760
    %v1211 = vsub.f32 %v736, %v1210
    %v1212 = vand.u32 %v1211, 4294901760
    %1213 = vmatpush1.msra.mxu0 %v1212
    %1214 = vmatprep.subr.mxu0 0.0
    %v1215 = vand.u32 %v735, 4294901760
    %v1216 = vsub.f32 %v735, %v1215
    %v1217 = vand.u32 %v1216, 4294901760
    %1218 = vmatpush1.msra.mxu0 %v1217
    %1219 = vmatprep.subr.mxu0 0.0
    %v1220 = vand.u32 %v734, 4294901760
    %v1221 = vsub.f32 %v734, %v1220
    %v1222 = vand.u32 %v1221, 4294901760
    %1223 = vmatpush1.msra.mxu0 %v1222
    %1224 = vmatprep.subr.mxu0 0.0
    %v1225 = vand.u32 %v733, 4294901760
    %v1226 = vsub.f32 %v733, %v1225
    %v1227 = vand.u32 %v1226, 4294901760
    %1228 = vmatpush1.msra.mxu0 %v1227
    %1229 = vmatprep.subr.mxu0 0.0
    %v1230 = vand.u32 %v732, 4294901760
    %v1231 = vsub.f32 %v732, %v1230
    %v1232 = vand.u32 %v1231, 4294901760
    %1233 = vmatpush1.msra.mxu0 %v1232
    %1234 = vmatprep.subr.mxu0 0.0
    %v1235 = vand.u32 %v731, 4294901760
    %v1236 = vsub.f32 %v731, %v1235
    %v1237 = vand.u32 %v1236, 4294901760
    %1238 = vmatpush1.msra.mxu0 %v1237
    %1239 = vmatprep.subr.mxu0 0.0
    %v1240 = vand.u32 %v730, 4294901760
    %v1241 = vsub.f32 %v730, %v1240
    %v1242 = vand.u32 %v1241, 4294901760
    %1243 = vmatpush1.msra.mxu0 %v1242
    %1244 = vmatprep.subr.mxu0 0.0
    %v1245 = vand.u32 %v729, 4294901760
    %v1246 = vsub.f32 %v729, %v1245
    %v1247 = vand.u32 %v1246, 4294901760
    %1248 = vmatpush1.msra.mxu0 %v1247
    %1249 = vmatprep.subr.mxu0 0.0
    %v1250 = vand.u32 %v728, 4294901760
    %v1251 = vsub.f32 %v728, %v1250
    %v1252 = vand.u32 %v1251, 4294901760
    %1253 = vmatpush1.msra.mxu0 %v1252
    %1254 = vmatprep.subr.mxu0 0.0
    %v1255 = vand.u32 %v727, 4294901760
    %v1256 = vsub.f32 %v727, %v1255
    %v1257 = vand.u32 %v1256, 4294901760
    %1258 = vmatpush1.msra.mxu0 %v1257
    %1259 = vmatprep.subr.mxu0 0.0
    %v1260 = vand.u32 %v726, 4294901760
    %v1261 = vsub.f32 %v726, %v1260
    %v1262 = vand.u32 %v1261, 4294901760
    %1263 = vmatpush1.msra.mxu0 %v1262
    %1264 = vmatprep.subr.mxu0 0.0
    %1265 = vmatpush2.msra.mxu0 0.0
    %1266 = vmatprep.subr.mxu0 0.0
    %1267 = vmatpush2.msra.mxu0 0.0
    %1268 = vmatprep.subr.mxu0 0.0
    %1269 = vmatpush2.msra.mxu0 0.0
    %1270 = vmatprep.subr.mxu0 0.0
    %1271 = vmatpush2.msra.mxu0 0.0
    %1272 = vmatprep.subr.mxu0 0.0
    %1273 = vmatpush2.msra.mxu0 0.0
    %1274 = vmatprep.subr.mxu0 0.0
    %1275 = vmatpush2.msra.mxu0 0.0
    %1276 = vmatprep.subr.mxu0 0.0
    %1277 = vmatpush2.msra.mxu0 0.0
    %1278 = vmatprep.subr.mxu0 0.0
    %1279 = vmatpush2.msra.mxu0 0.0
    %1280 = vmatprep.subr.mxu0 0.0
    %1281 = vmatpush2.msra.mxu0 0.0
    %1282 = vmatprep.subr.mxu0 0.0
    %1283 = vmatpush2.msra.mxu0 0.0
    %1284 = vmatprep.subr.mxu0 0.0
    %1285 = vmatpush2.msra.mxu0 0.0
    %1286 = vmatprep.subr.mxu0 0.0
    %1287 = vmatpush2.msra.mxu0 0.0
    %1288 = vmatprep.subr.mxu0 0.0
    %1289 = vmatpush2.msra.mxu0 0.0
    %1290 = vmatprep.subr.mxu0 0.0
    %1291 = vmatpush2.msra.mxu0 0.0
    %1292 = vmatprep.subr.mxu0 0.0
    %1293 = vmatpush2.msra.mxu0 0.0
    %1294 = vmatprep.subr.mxu0 0.0
    %1295 = vmatpush2.msra.mxu0 0.0
    %1296 = vmatprep.mubr.f32.mxu0 0.0
    %v1297 = vand.u32 %v725, 4294901760
    %1298 = vmatmul.mubr.f32.gmra.mxu0 %v1297
    %v1299 = vpop.f32.mrf.mxu0
    %v1300 = vadd.f32 %v1181, %v1299
    %v1301 = vpop.f32.mrf.mxu0
    %1302 = vdwg.mxu0
    %1303 = vmatprep.subr.mxu0 0.0
    %v1304 = vand.u32 %v741, 4294901760
    %1305 = vmatpush1.msra.mxu0 %v1304
    %1306 = vmatprep.subr.mxu0 0.0
    %v1307 = vand.u32 %v740, 4294901760
    %1308 = vmatpush1.msra.mxu0 %v1307
    %1309 = vmatprep.subr.mxu0 0.0
    %v1310 = vand.u32 %v739, 4294901760
    %1311 = vmatpush1.msra.mxu0 %v1310
    %1312 = vmatprep.subr.mxu0 0.0
    %v1313 = vand.u32 %v738, 4294901760
    %1314 = vmatpush1.msra.mxu0 %v1313
    %1315 = vmatprep.subr.mxu0 0.0
    %v1316 = vand.u32 %v737, 4294901760
    %1317 = vmatpush1.msra.mxu0 %v1316
    %1318 = vmatprep.subr.mxu0 0.0
    %v1319 = vand.u32 %v736, 4294901760
    %1320 = vmatpush1.msra.mxu0 %v1319
    %1321 = vmatprep.subr.mxu0 0.0
    %v1322 = vand.u32 %v735, 4294901760
    %1323 = vmatpush1.msra.mxu0 %v1322
    %1324 = vmatprep.subr.mxu0 0.0
    %v1325 = vand.u32 %v734, 4294901760
    %1326 = vmatpush1.msra.mxu0 %v1325
    %1327 = vmatprep.subr.mxu0 0.0
    %v1328 = vand.u32 %v733, 4294901760
    %1329 = vmatpush1.msra.mxu0 %v1328
    %1330 = vmatprep.subr.mxu0 0.0
    %v1331 = vand.u32 %v732, 4294901760
    %1332 = vmatpush1.msra.mxu0 %v1331
    %1333 = vmatprep.subr.mxu0 0.0
    %v1334 = vand.u32 %v731, 4294901760
    %1335 = vmatpush1.msra.mxu0 %v1334
    %1336 = vmatprep.subr.mxu0 0.0
    %v1337 = vand.u32 %v730, 4294901760
    %1338 = vmatpush1.msra.mxu0 %v1337
    %1339 = vmatprep.subr.mxu0 0.0
    %v1340 = vand.u32 %v729, 4294901760
    %1341 = vmatpush1.msra.mxu0 %v1340
    %1342 = vmatprep.subr.mxu0 0.0
    %v1343 = vand.u32 %v728, 4294901760
    %1344 = vmatpush1.msra.mxu0 %v1343
    %1345 = vmatprep.subr.mxu0 0.0
    %v1346 = vand.u32 %v727, 4294901760
    %1347 = vmatpush1.msra.mxu0 %v1346
    %1348 = vmatprep.subr.mxu0 0.0
    %v1349 = vand.u32 %v726, 4294901760
    %1350 = vmatpush1.msra.mxu0 %v1349
    %1351 = vmatprep.subr.mxu0 0.0
    %1352 = vmatpush2.msra.mxu0 0.0
    %1353 = vmatprep.subr.mxu0 0.0
    %1354 = vmatpush2.msra.mxu0 0.0
    %1355 = vmatprep.subr.mxu0 0.0
    %1356 = vmatpush2.msra.mxu0 0.0
    %1357 = vmatprep.subr.mxu0 0.0
    %1358 = vmatpush2.msra.mxu0 0.0
    %1359 = vmatprep.subr.mxu0 0.0
    %1360 = vmatpush2.msra.mxu0 0.0
    %1361 = vmatprep.subr.mxu0 0.0
    %1362 = vmatpush2.msra.mxu0 0.0
    %1363 = vmatprep.subr.mxu0 0.0
    %1364 = vmatpush2.msra.mxu0 0.0
    %1365 = vmatprep.subr.mxu0 0.0
    %1366 = vmatpush2.msra.mxu0 0.0
    %1367 = vmatprep.subr.mxu0 0.0
    %1368 = vmatpush2.msra.mxu0 0.0
    %1369 = vmatprep.subr.mxu0 0.0
    %1370 = vmatpush2.msra.mxu0 0.0
    %1371 = vmatprep.subr.mxu0 0.0
    %1372 = vmatpush2.msra.mxu0 0.0
    %1373 = vmatprep.subr.mxu0 0.0
    %1374 = vmatpush2.msra.mxu0 0.0
    %1375 = vmatprep.subr.mxu0 0.0
    %1376 = vmatpush2.msra.mxu0 0.0
    %1377 = vmatprep.subr.mxu0 0.0
    %1378 = vmatpush2.msra.mxu0 0.0
    %1379 = vmatprep.subr.mxu0 0.0
    %1380 = vmatpush2.msra.mxu0 0.0
    %1381 = vmatprep.subr.mxu0 0.0
    %1382 = vmatpush2.msra.mxu0 0.0
    %1383 = vmatprep.mubr.f32.mxu0 0.0
    %v1384 = vand.u32 %v725, 4294901760
    %1385 = vmatmul.mubr.f32.gmra.mxu0 %v1384
    %v1386 = vpop.f32.mrf.mxu0
    %v1387 = vadd.f32 %v1300, %v1386
    %v1388 = vpop.f32.mrf.mxu0
    %1389 = vdwg.mxu0
    %1390 = vst [vmem:[#allocation8] sm:$0xff] %v1387
    // Predicated region
    $region34: #{tpu_custom_call.1} parent=1 // pred_check
      _
    $region35: #{tpu_custom_call.1} parent=1 // pred_check_branch
      %1392 = sbr.rel (0) target = $region37
    $region36: #{tpu_custom_call.1} parent=1 // pred_region
      %s1394 = ssub.s32 128, 128
      %1395 = vsyncadd [#allocation4], %s1394
      %s1397 = sshll.u32 [#allocation8], 4
      %s1398 = int_to_ptr.vmem [resolvable:$true] %s1397
      %1400 = dma.vmem_to_hbm [thread:$0]  %s1398, 128, %s5, [#allocation4]
    $region37: #{tpu_custom_call.1} parent=1 // pred_fallthru
      _
    // Predicated region
    $region38: #{tpu_custom_call.1} parent=1 // pred_check
      _
    $region39: #{tpu_custom_call.1} parent=1 // pred_check_branch
      %1402 = sbr.rel (0) target = $region41
    $region40: #{tpu_custom_call.1} parent=1 // pred_region
      %1403 = dma.done [#allocation4], 128
    $region41: #{tpu_custom_call.1} parent=1 // pred_fallthru
      _
    %1404 = vsyncpa [#allocation3], 1
    %1405 = vsyncpa [#allocation6], 1
    %1406 = vsyncpa [#allocation4], 1

</llo_original>
